<compile_context>
chip_gen: v6e
topology: v6e:2x2x1
jax: 0.10.0
libtpu: 0.0.40
codegen_flags: <defaults>
</compile_context>

<pallas_src>
import jax
import jax.numpy as jnp
from jax.experimental import pallas as pl
from jax.experimental.pallas import tpu as pltpu

EPS = 1e-07      # module-level EPS from the PyTorch file
BN_EPS = 1e-05   # nn.BatchNorm1d default eps


def vn_batchnorm_kernel(x_ref, w_ref, b_ref, o_ref):
    # x_ref block: [B, 3*tc, N], densely packed with row 3*c + v holding
    # vector component v of channel c (channel-major, component-minor).
    B, three_tc, N = x_ref.shape
    tc = three_tc // 3

    # Strided sublane loads: component v of every channel in the tile -> [B, tc, N]
    x0 = x_ref[:, pl.ds(0, tc, stride=3), :].astype(jnp.float32)
    x1 = x_ref[:, pl.ds(1, tc, stride=3), :].astype(jnp.float32)
    x2 = x_ref[:, pl.ds(2, tc, stride=3), :].astype(jnp.float32)

    # ||x|| along the 3-vector axis (+ EPS), matching torch.norm(x, dim=2) + EPS.
    norm = jnp.sqrt(x0 * x0 + x1 * x1 + x2 * x2) + EPS          # [B, tc, N]

    # BatchNorm1d training-mode statistics: biased variance over (B, N) per
    # channel.  Two-pass (mean, then centered var) — extra VPU work is hidden
    # under the HBM roofline and is numerically safer for positive norms.
    cnt = jnp.float32(B * N)
    mean = jnp.sum(norm, axis=(0, 2), keepdims=True) / cnt      # [1, tc, 1]
    centered = norm - mean                                      # [B, tc, N]
    var = jnp.sum(centered * centered, axis=(0, 2), keepdims=True) / cnt
    inv_std = jax.lax.rsqrt(var + BN_EPS)                       # [1, tc, 1]

    gamma = inv_std * w_ref[...]                                # [1, tc, 1]
    norm_bn = centered * gamma + b_ref[...]                     # [B, tc, N]

    # out = x / norm * norm_bn == x * (norm_bn * (1/norm)); 1/x on the EUP.
    scale = norm_bn * pl.reciprocal(norm, approx=True)          # [B, tc, N]

    # Dense-packed, stride-3 sublane stores (cover every row of the block).
    o_ref[:, pl.ds(0, tc, stride=3), :] = (x0 * scale).astype(o_ref.dtype)
    o_ref[:, pl.ds(1, tc, stride=3), :] = (x1 * scale).astype(o_ref.dtype)
    o_ref[:, pl.ds(2, tc, stride=3), :] = (x2 * scale).astype(o_ref.dtype)


def _pick_channel_tile(B, C, N, itemsize, block_budget_bytes=2 << 20):
    """Largest channel tile tc that (a) divides C, (b) keeps 3*tc a multiple of
    8 (unless tc == C, in which case the block spans the full sublane axis),
    and (c) keeps one [B, 3*tc, N] block under budget so the double-buffered
    in+out blocks stay well inside every generation's default scoped VMEM
    (v5e 16 MiB / v6e 32 MiB / v7x 32 MiB of 64 MiB physical)."""
    def block_bytes(tc):
        return B * 3 * tc * N * itemsize

    if block_bytes(C) <= block_budget_bytes:
        return C
    for cand in range(8 * (C // 8), 0, -8):       # multiples of 8, descending
        if C % cand == 0 and block_bytes(cand) <= block_budget_bytes:
            return cand
    return C  # fallback: single block (always correct; may need more VMEM)


def vn_batch_norm(x, weight, bias):
    """x: [B, C, 3, N]; weight/bias: [C] (BatchNorm1d affine parameters)."""
    B, C, V, N = x.shape
    assert V == 3, "vector-neuron features must have a size-3 vector axis"

    # Free, contiguous view: row 3*c + v of dim 1 is component v of channel c.
    x2 = x.reshape(B, C * 3, N)
    w = weight.reshape(1, C, 1).astype(jnp.float32)
    b = bias.reshape(1, C, 1).astype(jnp.float32)

    tc = _pick_channel_tile(B, C, N, x.dtype.itemsize)
    grid = (C // tc,)

    out2 = pl.pallas_call(
        vn_batchnorm_kernel,
        out_shape=jax.ShapeDtypeStruct((B, C * 3, N), x.dtype),
        grid=grid,
        in_specs=[
            pl.BlockSpec((B, 3 * tc, N), lambda i: (0, i, 0)),
            pl.BlockSpec((1, tc, 1), lambda i: (0, i, 0)),
            pl.BlockSpec((1, tc, 1), lambda i: (0, i, 0)),
        ],
        out_specs=pl.BlockSpec((B, 3 * tc, N), lambda i: (0, i, 0)),
        compiler_params=pltpu.CompilerParams(
            dimension_semantics=("parallel",),
        ),
    )(x2, w, b)
    return out2.reshape(B, C, 3, N)


def vn_batch_norm_reference(x, weight, bias):
    """Pure-JAX reference mirroring the PyTorch forward (training-mode BN)."""
    norm = jnp.sqrt(jnp.sum(x * x, axis=2)) + EPS               # [B, C, N]
    mean = jnp.mean(norm, axis=(0, 2), keepdims=True)
    var = jnp.mean((norm - mean) ** 2, axis=(0, 2), keepdims=True)
    norm_bn = (norm - mean) / jnp.sqrt(var + BN_EPS)
    norm_bn = norm_bn * weight.reshape(1, -1, 1) + bias.reshape(1, -1, 1)
    return x / norm[:, :, None, :] * norm_bn[:, :, None, :]


if __name__ == "__main__":
    key = jax.random.PRNGKey(0)
    B, C, N = 2, 4, 128          # batch=2, num_features=4, n_samples=128 (lane-dense)
    x = jax.random.normal(key, (B, C, 3, N), dtype=jnp.float32)

    # Deterministic BatchNorm1d affine parameters (synthetic, not a checkpoint).
    weight = 1.0 + 0.1 * jnp.arange(C, dtype=jnp.float32)
    bias = 0.01 * jnp.arange(C, dtype=jnp.float32)

    out = vn_batch_norm(x, weight, bias)
    out = jax.block_until_ready(out)

    ref = vn_batch_norm_reference(x, weight, bias)
    assert out.shape == x.shape and out.dtype == x.dtype
    # Tolerance covers the EUP approximate reciprocal.
    assert jnp.allclose(out, ref, atol=5e-3, rtol=5e-3), "mismatch vs reference"

    print("KERNEL_OK")
</pallas_src>

<mosaic_0001>
module attributes {stable_mosaic.version = 11 : i64} {
  func.func @vn_batchnorm_kernel(%arg0: i32, %arg1: memref<2x12x128xf32, #tpu.memory_space<vmem>>, %arg2: memref<1x4x1xf32, #tpu.memory_space<vmem>>, %arg3: memref<1x4x1xf32, #tpu.memory_space<vmem>>, %arg4: memref<2x12x128xf32, #tpu.memory_space<vmem>>) attributes {dimension_semantics = [#tpu.dimension_semantics<parallel>], iteration_bounds = array<i64: 1>, scalar_prefetch = 0 : i64, scratch_operands = 0 : i64, tpu.core_type = #tpu.core_type<tc>, window_params = [{transform_indices = @transform_0, window_bounds = array<i64: 2, 12, 128>}, {transform_indices = @transform_1, window_bounds = array<i64: 1, 4, 1>}, {transform_indices = @transform_2, window_bounds = array<i64: 1, 4, 1>}, {transform_indices = @transform_3, window_bounds = array<i64: 2, 12, 128>}]} {
    %c0 = arith.constant 0 : index
    %c0_0 = arith.constant 0 : index
    %c0_1 = arith.constant 0 : index
    %0 = tpu.strided_load %arg1[%c0, %c0_0, %c0_1] {strides = array<i32: 1, 3, 1>} : memref<2x12x128xf32, #tpu.memory_space<vmem>>, vector<2x4x128xf32>
    %c0_2 = arith.constant 0 : index
    %c1 = arith.constant 1 : index
    %c0_3 = arith.constant 0 : index
    %1 = tpu.strided_load %arg1[%c0_2, %c1, %c0_3] {strides = array<i32: 1, 3, 1>} : memref<2x12x128xf32, #tpu.memory_space<vmem>>, vector<2x4x128xf32>
    %c0_4 = arith.constant 0 : index
    %c2 = arith.constant 2 : index
    %c0_5 = arith.constant 0 : index
    %2 = tpu.strided_load %arg1[%c0_4, %c2, %c0_5] {strides = array<i32: 1, 3, 1>} : memref<2x12x128xf32, #tpu.memory_space<vmem>>, vector<2x4x128xf32>
    %3 = arith.mulf %0, %0 : vector<2x4x128xf32>
    %4 = arith.mulf %1, %1 : vector<2x4x128xf32>
    %5 = arith.addf %3, %4 : vector<2x4x128xf32>
    %6 = arith.mulf %2, %2 : vector<2x4x128xf32>
    %7 = arith.addf %5, %6 : vector<2x4x128xf32>
    %8 = math.sqrt %7 : vector<2x4x128xf32>
    %cst = arith.constant 1.000000e-07 : f32
    %9 = vector.broadcast %cst : f32 to vector<2x4x128xf32>
    %10 = arith.addf %8, %9 : vector<2x4x128xf32>
    %cst_6 = arith.constant dense<0.000000e+00> : vector<4xf32>
    %11 = vector.multi_reduction <add>, %10, %cst_6 [0, 2] : vector<2x4x128xf32> to vector<4xf32>
    %12 = vector.shape_cast %11 : vector<4xf32> to vector<1x4x1xf32>
    %cst_7 = arith.constant 2.560000e+02 : f32
    %13 = vector.broadcast %cst_7 : f32 to vector<1x4x1xf32>
    %14 = arith.divf %12, %13 : vector<1x4x1xf32>
    %15 = vector.broadcast %14 : vector<1x4x1xf32> to vector<2x4x128xf32>
    %16 = arith.subf %10, %15 : vector<2x4x128xf32>
    %17 = arith.mulf %16, %16 : vector<2x4x128xf32>
    %cst_8 = arith.constant dense<0.000000e+00> : vector<4xf32>
    %18 = vector.multi_reduction <add>, %17, %cst_8 [0, 2] : vector<2x4x128xf32> to vector<4xf32>
    %19 = vector.shape_cast %18 : vector<4xf32> to vector<1x4x1xf32>
    %cst_9 = arith.constant 2.560000e+02 : f32
    %20 = vector.broadcast %cst_9 : f32 to vector<1x4x1xf32>
    %21 = arith.divf %19, %20 : vector<1x4x1xf32>
    %cst_10 = arith.constant 9.99999974E-6 : f32
    %22 = vector.broadcast %cst_10 : f32 to vector<1x4x1xf32>
    %23 = arith.addf %21, %22 : vector<1x4x1xf32>
    %24 = math.rsqrt %23 : vector<1x4x1xf32>
    %c0_11 = arith.constant 0 : index
    %c0_12 = arith.constant 0 : index
    %c0_13 = arith.constant 0 : index
    %25 = vector.load %arg2[%c0_11, %c0_12, %c0_13] : memref<1x4x1xf32, #tpu.memory_space<vmem>>, vector<1x4x1xf32>
    %26 = arith.mulf %24, %25 : vector<1x4x1xf32>
    %27 = vector.broadcast %26 : vector<1x4x1xf32> to vector<2x4x128xf32>
    %28 = arith.mulf %16, %27 : vector<2x4x128xf32>
    %c0_14 = arith.constant 0 : index
    %c0_15 = arith.constant 0 : index
    %c0_16 = arith.constant 0 : index
    %29 = vector.load %arg3[%c0_14, %c0_15, %c0_16] : memref<1x4x1xf32, #tpu.memory_space<vmem>>, vector<1x4x1xf32>
    %30 = vector.broadcast %29 : vector<1x4x1xf32> to vector<2x4x128xf32>
    %31 = arith.addf %28, %30 : vector<2x4x128xf32>
    %32 = tpu.reciprocal %10 {approx = true} : vector<2x4x128xf32> -> vector<2x4x128xf32>
    %33 = arith.mulf %31, %32 : vector<2x4x128xf32>
    %34 = arith.mulf %0, %33 : vector<2x4x128xf32>
    %c0_17 = arith.constant 0 : index
    %c0_18 = arith.constant 0 : index
    %c0_19 = arith.constant 0 : index
    %35 = tpu.strided_load %arg4[%c0_17, %c0_18, %c0_19] {strides = array<i32: 1, 3, 1>} : memref<2x12x128xf32, #tpu.memory_space<vmem>>, vector<2x4x128xf32>
    tpu.strided_store %arg4[%c0_17, %c0_18, %c0_19], %34 {strides = array<i32: 1, 3, 1>} : memref<2x12x128xf32, #tpu.memory_space<vmem>>, vector<2x4x128xf32>
    %36 = arith.mulf %1, %33 : vector<2x4x128xf32>
    %c0_20 = arith.constant 0 : index
    %c1_21 = arith.constant 1 : index
    %c0_22 = arith.constant 0 : index
    %37 = tpu.strided_load %arg4[%c0_20, %c1_21, %c0_22] {strides = array<i32: 1, 3, 1>} : memref<2x12x128xf32, #tpu.memory_space<vmem>>, vector<2x4x128xf32>
    tpu.strided_store %arg4[%c0_20, %c1_21, %c0_22], %36 {strides = array<i32: 1, 3, 1>} : memref<2x12x128xf32, #tpu.memory_space<vmem>>, vector<2x4x128xf32>
    %38 = arith.mulf %2, %33 : vector<2x4x128xf32>
    %c0_23 = arith.constant 0 : index
    %c2_24 = arith.constant 2 : index
    %c0_25 = arith.constant 0 : index
    %39 = tpu.strided_load %arg4[%c0_23, %c2_24, %c0_25] {strides = array<i32: 1, 3, 1>} : memref<2x12x128xf32, #tpu.memory_space<vmem>>, vector<2x4x128xf32>
    tpu.strided_store %arg4[%c0_23, %c2_24, %c0_25], %38 {strides = array<i32: 1, 3, 1>} : memref<2x12x128xf32, #tpu.memory_space<vmem>>, vector<2x4x128xf32>
    return
  }
  func.func @transform_0(%arg0: i32) -> (i32, i32, i32) {
    %c0_i32 = arith.constant 0 : i32
    %c0_i32_0 = arith.constant 0 : i32
    %c0_i32_1 = arith.constant 0 : i32
    return %c0_i32, %arg0, %c0_i32_0 : i32, i32, i32
  }
  func.func @transform_1(%arg0: i32) -> (i32, i32, i32) {
    %c0_i32 = arith.constant 0 : i32
    %c0_i32_0 = arith.constant 0 : i32
    %c0_i32_1 = arith.constant 0 : i32
    return %c0_i32, %arg0, %c0_i32_0 : i32, i32, i32
  }
  func.func @transform_2(%arg0: i32) -> (i32, i32, i32) {
    %c0_i32 = arith.constant 0 : i32
    %c0_i32_0 = arith.constant 0 : i32
    %c0_i32_1 = arith.constant 0 : i32
    return %c0_i32, %arg0, %c0_i32_0 : i32, i32, i32
  }
  func.func @transform_3(%arg0: i32) -> (i32, i32, i32) {
    %c0_i32 = arith.constant 0 : i32
    %c0_i32_0 = arith.constant 0 : i32
    %c0_i32_1 = arith.constant 0 : i32
    return %c0_i32, %arg0, %c0_i32_0 : i32, i32, i32
  }
}

</mosaic_0001>

<llo_original>
// kernel: tpu_custom_call.1
$region0: #{tpu_custom_call.1}
  #allocation0 [shape = 'u32[]', space=smem, size = 0x4, offset = 0x4, fixed_abs, tag = 'smem constant byte address 0x4 - core index']
  #allocation1 [shape = 'u32[144,128]{1,0:T(1,128)}', space=vmem, size = 0x12000, scoped, tag = 'internal scratch']
  %s0 = inlined_call_operand.vmem [shape: f32[2,12,128], index: 0, kind: input, shape index: {}]
  %s1 = inlined_call_operand.vmem [shape: f32[1,4,1], index: 1, kind: input, shape index: {}]
  %s2 = inlined_call_operand.vmem [shape: f32[1,4,1], index: 2, kind: input, shape index: {}]
  %s3 = inlined_call_operand.vmem [shape: f32[2,12,128], index: 3, kind: output, shape index: {}]
  %s4 = sld [smem:[#allocation0]]
  $region22: #{tpu_custom_call.1} parent=0
    _
  %s6 = ssub.s32 1, %s4
  %s7 = scalar_select 0, %s6, %s4
  // Predicated region
  $region2: #{tpu_custom_call.1} parent=0 // pred_check
    _
  $region3: #{tpu_custom_call.1} parent=0 // pred_check_branch
    %9 = sbr.rel (0) target = $region5
  $region4: #{tpu_custom_call.1} parent=0 // pred_region
    _
  $region5: #{tpu_custom_call.1} parent=0 // pred_fallthru
    _
  // Predicated region
  $region6: #{tpu_custom_call.1} parent=0 // pred_check
    _
  $region7: #{tpu_custom_call.1} parent=0 // pred_check_branch
    %11 = sbr.rel (0) target = $region9
  $region8: #{tpu_custom_call.1} parent=0 // pred_region
    _
  $region9: #{tpu_custom_call.1} parent=0 // pred_fallthru
    _
  // Predicated region
  $region10: #{tpu_custom_call.1} parent=0 // pred_check
    _
  $region11: #{tpu_custom_call.1} parent=0 // pred_check_branch
    %13 = sbr.rel (0) target = $region13
  $region12: #{tpu_custom_call.1} parent=0 // pred_region
    _
  $region13: #{tpu_custom_call.1} parent=0 // pred_fallthru
    _
  %v14 = vld [vmem:[%s0] ss:$3 sm:$0xf]
  %s15 = scalar_lea.vmem %s0, 16
  %v16 = vld [vmem:[%s15] ss:$3 sm:$0xf]
  %s17 = scalar_lea.vmem %s0, 1
  %v18 = vld [vmem:[%s17] ss:$3 sm:$0xf]
  %s19 = scalar_lea.vmem %s0, 17
  %v20 = vld [vmem:[%s19] ss:$3 sm:$0xf]
  %s21 = scalar_lea.vmem %s0, 2
  %v22 = vld [vmem:[%s21] ss:$3 sm:$0xf]
  %s23 = scalar_lea.vmem %s0, 18
  %v24 = vld [vmem:[%s23] ss:$3 sm:$0xf]
  %v25 = vmul.f32 %v14, %v14
  %v26 = vmul.f32 %v16, %v16
  %v27 = vmul.f32 %v18, %v18
  %v28 = vmul.f32 %v20, %v20
  %v29 = vadd.f32 %v25, %v27
  %v30 = vadd.f32 %v26, %v28
  %v31 = vmul.f32 %v22, %v22
  %v32 = vmul.f32 %v24, %v24
  %v33 = vadd.f32 %v29, %v31
  %v34 = vadd.f32 %v30, %v32
  %v35 = vrsqrt.pop %v33
  %v36 = vmul.f32 %v33, %v35
  %vm37 = vcmp.eq.f32.partialorder %v33, inf
  %v38 = vsel %vm37, %v33, %v36
  %vm39 = vcmp.eq.f32.partialorder %v33, 0.0
  %v40 = vand.u32 %v33, 2147483648
  %v41 = vsel %vm39, %v40, %v38
  %v42 = vrsqrt.pop %v34
  %v43 = vmul.f32 %v34, %v42
  %vm44 = vcmp.eq.f32.partialorder %v34, inf
  %v45 = vsel %vm44, %v34, %v43
  %vm46 = vcmp.eq.f32.partialorder %v34, 0.0
  %v47 = vand.u32 %v34, 2147483648
  %v48 = vsel %vm46, %v47, %v45
  %v49 = vadd.f32 %v41, 1e-07
  %v50 = vadd.f32 %v48, 1e-07
  %vm51 = vcmask 1043456
  %v52 = vsel %vm51, %v49, 0.0
  %v53 = vsel %vm51, %v50, 0.0
  %v54 = vadd.f32 %v52, %v53
  %55 = vadd.xlane.f32.xlu0 %v54
  %v56 = vpop.xlane.xlu0 %55
  %v57 = vrcp.pop 256.0
  %v58 = vmul.f32 %v56, %v57
  %v59 = vsub.f32 %v49, %v58
  %v60 = vsub.f32 %v50, %v58
  %v61 = vmul.f32 %v59, %v59
  %v62 = vmul.f32 %v60, %v60
  %v63 = vsel %vm51, %v61, 0.0
  %v64 = vsel %vm51, %v62, 0.0
  %v65 = vadd.f32 %v63, %v64
  %66 = vadd.xlane.f32.xlu0 %v65
  %v67 = vpop.xlane.xlu0 %66
  %v68 = vmul.f32 %v67, %v57
  %v69 = vadd.f32 %v68, 1e-05
  %v70 = vrsqrt.pop %v69
  %v71 = vld [vmem:[%s1] sm:$0xf]
  %v72 = vmul.f32 %v70, %v71
  %74 = vset.pattern.permute.xlu0 0
  %75 = vperm.xlu0 %74, %v72
  %v76 = vpop.permute.xlu0 %75
  %v78 = vmul.f32 %v59, %v76
  %v79 = vmul.f32 %v60, %v76
  %v80 = vld [vmem:[%s2] sm:$0xf]
  %82 = vset.pattern.permute.xlu0 0
  %83 = vperm.xlu0 %82, %v80
  %v84 = vpop.permute.xlu0 %83
  %v86 = vadd.f32 %v78, %v84
  %v87 = vadd.f32 %v79, %v84
  %v88 = vrcp.pop %v49
  %v89 = vrcp.pop %v50
  %v90 = vmul.f32 %v86, %v88
  %v91 = vmul.f32 %v87, %v89
  %v92 = vmul.f32 %v14, %v90
  %v93 = vmul.f32 %v16, %v91
  %94 = vst [vmem:[%s3] ss:$3 sm:$0xf] %v92
  %s95 = scalar_lea.vmem %s3, 16
  %96 = vst [vmem:[%s95] ss:$3 sm:$0xf] %v93
  %v97 = vmul.f32 %v18, %v90
  %v98 = vmul.f32 %v20, %v91
  %s99 = scalar_lea.vmem %s3, 1
  %100 = vst [vmem:[%s99] ss:$3 sm:$0xf] %v97
  %s101 = scalar_lea.vmem %s3, 17
  %102 = vst [vmem:[%s101] ss:$3 sm:$0xf] %v98
  %v103 = vmul.f32 %v22, %v90
  %v104 = vmul.f32 %v24, %v91
  %s105 = scalar_lea.vmem %s3, 2
  %106 = vst [vmem:[%s105] ss:$3 sm:$0xf] %v103
  %s107 = scalar_lea.vmem %s3, 18
  %108 = vst [vmem:[%s107] ss:$3 sm:$0xf] %v104
  // Predicated region
  $region14: #{tpu_custom_call.1} parent=0 // pred_check
    _
  $region15: #{tpu_custom_call.1} parent=0 // pred_check_branch
    %110 = sbr.rel (0) target = $region17
  $region16: #{tpu_custom_call.1} parent=0 // pred_region
    _
  $region17: #{tpu_custom_call.1} parent=0 // pred_fallthru
    _
  // Predicated region
  $region18: #{tpu_custom_call.1} parent=0 // pred_check
    _
  $region19: #{tpu_custom_call.1} parent=0 // pred_check_branch
    %112 = sbr.rel (0) target = $region21
  $region20: #{tpu_custom_call.1} parent=0 // pred_region
    _
  $region21: #{tpu_custom_call.1} parent=0 // pred_fallthru
    _

</llo_original>
